<compile_context>
chip_gen: v5e
topology: v5e:2x2
jax: 0.10.0
libtpu: 0.0.40
codegen_flags: <defaults>
</compile_context>

<pallas_src>
import jax
import jax.numpy as jnp
from jax.experimental import pallas as pl
from jax.experimental.pallas import tpu as pltpu

IMG_HEIGHT = 28
IMG_WIDTH = 28
CLASSES = 10
D = IMG_HEIGHT * IMG_WIDTH          # 784
C_PAD = 128                          # class dim padded to one full lane width


def _linear_kernel(x_ref, w_ref, b_ref, o_ref):
    # x_ref: [tm, D]  w_ref: [D, C_PAD]  b_ref: [1, C_PAD]  o_ref: [tm, C_PAD]
    acc = jnp.dot(x_ref[...], w_ref[...], preferred_element_type=jnp.float32)
    o_ref[...] = (acc + b_ref[...]).astype(o_ref.dtype)


def prepare_params(weight, bias):
    """One-time parameter prep (do at init, NOT per forward call).

    weight: [CLASSES, D] -> [D, C_PAD]  (transposed + zero-padded, lane-dense)
    bias:   [CLASSES]    -> [1, C_PAD]
    """
    w_p = jnp.zeros((D, C_PAD), jnp.float32).at[:, :CLASSES].set(weight.T)
    b_p = jnp.zeros((1, C_PAD), jnp.float32).at[:, :CLASSES].set(bias)
    return w_p, b_p


def logreg_forward(x, w_p, b_p):
    """x: [B, 1, IMG_H, IMG_W] f32; w_p: [D, C_PAD]; b_p: [1, C_PAD] -> [B, CLASSES]."""
    B = x.shape[0]
    x_flat = x.reshape(B, D)                       # nn.Flatten

    # Pad batch to a sublane multiple; tile the batch only when it is large
    # enough that pipelining beats the per-step grid overhead.
    bp = ((B + 7) // 8) * 8
    if bp <= 512:
        tm = bp                                    # single block, grid=(1,)
    else:
        tm = 512                                   # pipelined batch tiles (~1.6 MiB x-tile)
        bp = ((bp + tm - 1) // tm) * tm
    if bp != B:
        x_flat = jnp.pad(x_flat, ((0, bp - B), (0, 0)))

    out = pl.pallas_call(
        _linear_kernel,
        out_shape=jax.ShapeDtypeStruct((bp, C_PAD), jnp.float32),
        grid_spec=pl.GridSpec(
            grid=(bp // tm,),
            in_specs=[
                pl.BlockSpec((tm, D), lambda i: (i, 0)),       # x tile (pipelined over batch)
                pl.BlockSpec((D, C_PAD), lambda i: (0, 0)),    # weight, resident across grid
                pl.BlockSpec((1, C_PAD), lambda i: (0, 0)),    # bias, resident across grid
            ],
            out_specs=pl.BlockSpec((tm, C_PAD), lambda i: (i, 0)),
        ),
        compiler_params=pltpu.CompilerParams(
            dimension_semantics=("parallel",),     # batch tiles shard across TCs (v7x megacore)
        ),
    )(x_flat, w_p, b_p)

    return out[:B, :CLASSES]


if __name__ == "__main__":
    key = jax.random.PRNGKey(0)
    k_x, k_w, k_b = jax.random.split(key, 3)

    B = 8
    # Deterministic synthetic parameters (shapes from nn.Linear(784, 10)).
    bound = 1.0 / (D ** 0.5)
    weight = jax.random.uniform(k_w, (CLASSES, D), jnp.float32, -bound, bound)
    bias = jax.random.uniform(k_b, (CLASSES,), jnp.float32, -bound, bound)

    x = jax.random.normal(k_x, (B, 1, IMG_HEIGHT, IMG_WIDTH), jnp.float32)

    # One-time parameter prep (equivalent of module init), then forward.
    w_p, b_p = prepare_params(weight, bias)
    logits = jax.block_until_ready(logreg_forward(x, w_p, b_p))

    # Reference check in plain JAX.
    ref = x.reshape(B, D) @ weight.T + bias
    assert logits.shape == (B, CLASSES)
    assert jnp.allclose(logits, ref, atol=1e-4, rtol=1e-4)

    print("KERNEL_OK")
</pallas_src>

<mosaic_0001>
module attributes {stable_mosaic.version = 11 : i64} {
  func.func @_linear_kernel(%arg0: i32, %arg1: memref<8x784xf32, #tpu.memory_space<vmem>>, %arg2: memref<784x128xf32, #tpu.memory_space<vmem>>, %arg3: memref<1x128xf32, #tpu.memory_space<vmem>>, %arg4: memref<8x128xf32, #tpu.memory_space<vmem>>) attributes {dimension_semantics = [#tpu.dimension_semantics<parallel>], iteration_bounds = array<i64: 1>, scalar_prefetch = 0 : i64, scratch_operands = 0 : i64, tpu.core_type = #tpu.core_type<tc>, window_params = [{transform_indices = @transform_0, window_bounds = array<i64: 8, 784>}, {pipeline_mode = #tpu.pipeline_mode<synchronous>, transform_indices = @transform_1, window_bounds = array<i64: 784, 128>}, {pipeline_mode = #tpu.pipeline_mode<synchronous>, transform_indices = @transform_2, window_bounds = array<i64: 1, 128>}, {transform_indices = @transform_3, window_bounds = array<i64: 8, 128>}]} {
    %c0 = arith.constant 0 : index
    %c0_0 = arith.constant 0 : index
    %0 = vector.load %arg1[%c0, %c0_0] : memref<8x784xf32, #tpu.memory_space<vmem>>, vector<8x784xf32>
    %c0_1 = arith.constant 0 : index
    %c0_2 = arith.constant 0 : index
    %1 = vector.load %arg2[%c0_1, %c0_2] : memref<784x128xf32, #tpu.memory_space<vmem>>, vector<784x128xf32>
    %cst = arith.constant dense<0.000000e+00> : vector<8x128xf32>
    %2 = tpu.matmul %0, %1, %cst {dimension_numbers = #tpu.dot_dimension_numbers<[1], [0], [0], [1], [0, 0, 1, 1], [], []>} : vector<8x784xf32>, vector<784x128xf32>, vector<8x128xf32> -> vector<8x128xf32>
    %c0_3 = arith.constant 0 : index
    %c0_4 = arith.constant 0 : index
    %3 = vector.load %arg3[%c0_3, %c0_4] : memref<1x128xf32, #tpu.memory_space<vmem>>, vector<1x128xf32>
    %4 = vector.broadcast %3 : vector<1x128xf32> to vector<8x128xf32>
    %5 = arith.addf %2, %4 : vector<8x128xf32>
    %c0_5 = arith.constant 0 : index
    %c0_6 = arith.constant 0 : index
    %6 = vector.load %arg4[%c0_5, %c0_6] : memref<8x128xf32, #tpu.memory_space<vmem>>, vector<8x128xf32>
    tpu.vector_store %arg4[%c0_5, %c0_6], %5 {strides = array<i32>} : memref<8x128xf32, #tpu.memory_space<vmem>>, vector<8x128xf32>,
    return
  }
  func.func @transform_0(%arg0: i32) -> (i32, i32) {
    %c0_i32 = arith.constant 0 : i32
    %c0_i32_0 = arith.constant 0 : i32
    return %arg0, %c0_i32 : i32, i32
  }
  func.func @transform_1(%arg0: i32) -> (i32, i32) {
    %c0_i32 = arith.constant 0 : i32
    %c0_i32_0 = arith.constant 0 : i32
    %c0_i32_1 = arith.constant 0 : i32
    return %c0_i32, %c0_i32_0 : i32, i32
  }
  func.func @transform_2(%arg0: i32) -> (i32, i32) {
    %c0_i32 = arith.constant 0 : i32
    %c0_i32_0 = arith.constant 0 : i32
    %c0_i32_1 = arith.constant 0 : i32
    return %c0_i32, %c0_i32_0 : i32, i32
  }
  func.func @transform_3(%arg0: i32) -> (i32, i32) {
    %c0_i32 = arith.constant 0 : i32
    %c0_i32_0 = arith.constant 0 : i32
    return %arg0, %c0_i32 : i32, i32
  }
}

</mosaic_0001>

<llo_original>
// kernel: tpu_custom_call.1
$region0: #{tpu_custom_call.1}
  #allocation0 [shape = 'u32[]', space=smem, size = 0x4, offset = 0x4, fixed_abs, tag = 'smem constant byte address 0x4 - core index']
  #allocation1 [shape = 'u32[72,128]{1,0:T(1,128)}', space=vmem, size = 0x9000, scoped, tag = 'internal scratch']
  %s0 = inlined_call_operand.hbm [shape: f32[8,784], index: 0, kind: input, shape index: {}]
  %s1 = inlined_call_operand.hbm [shape: f32[784,128], index: 1, kind: input, shape index: {}]
  %s2 = inlined_call_operand.vmem [shape: f32[1,128], index: 2, kind: input, shape index: {}]
  %s3 = inlined_call_operand.hbm [shape: f32[8,128], index: 3, kind: output, shape index: {}]
  %s4 = sld [smem:[#allocation0]]
  $region30: #{tpu_custom_call.1} parent=0
    _
  %s6 = ssub.s32 1, %s4
  %s7 = scalar_select 0, %s6, %s4
  $region1: #{tpu_custom_call.1} parent=0
    #allocation2 [shape = 'u8[28672]{0}', space=vmem, size = 0x7000, scoped, tag = 'input window, operand 0, single buffered']
    #allocation3 [shape = 's32[1]{0}', space=sflag, size = 0x4, scoped, tag = 'scoped memory for tpu_custom_call.1']
    #allocation4 [shape = 's32[1]{0}', space=sflag, size = 0x4, scoped, tag = 'scoped memory for tpu_custom_call.1']
    #allocation5 [shape = 'u8[401408]{0}', space=vmem, size = 0x62000, scoped, tag = 'input window, operand 1, single buffered']
    #allocation6 [shape = 's32[1]{0}', space=sflag, size = 0x4, scoped, tag = 'scoped memory for tpu_custom_call.1']
    #allocation7 [shape = 'u8[4096]{0}', space=vmem, size = 0x1000, scoped, tag = 'output window, operand 0, single buffered']
    %8 = vsyncpa [#allocation3], 0
    %9 = vsyncpa [#allocation6], 0
    %10 = vsyncpa [#allocation4], 0
    // Predicated region
    $region2: #{tpu_custom_call.1} parent=1 // pred_check
      _
    $region3: #{tpu_custom_call.1} parent=1 // pred_check_branch
      %12 = sbr.rel (0) target = $region5
    $region4: #{tpu_custom_call.1} parent=1 // pred_region
      %14 = vsyncadd [#allocation3], 0
      %s16 = sshll.u32 %s0, 4
      %s17 = int_to_ptr.hbm [resolvable:$true] %s16
      %s18 = sshll.u32 [#allocation2], 4
      %s19 = int_to_ptr.vmem [resolvable:$true] %s18
      %21 = dma.hbm_to_vmem [thread:$0]  %s17, 896, %s19, [#allocation3]
    $region5: #{tpu_custom_call.1} parent=1 // pred_fallthru
      _
    // Predicated region
    $region6: #{tpu_custom_call.1} parent=1 // pred_check
      _
    $region7: #{tpu_custom_call.1} parent=1 // pred_check_branch
      %23 = sbr.rel (0) target = $region9
    $region8: #{tpu_custom_call.1} parent=1 // pred_region
      %25 = vsyncadd [#allocation6], 0
      %s26 = sshll.u32 %s1, 4
      %s27 = int_to_ptr.hbm [resolvable:$true] %s26
      %s28 = sshll.u32 [#allocation5], 4
      %s29 = int_to_ptr.vmem [resolvable:$true] %s28
      %34 = dma.hbm_to_vmem [thread:$0]  %s27, 12544, %s29, [#allocation6], 128, 128, 8
    $region9: #{tpu_custom_call.1} parent=1 // pred_fallthru
      _
    // Predicated region
    $region10: #{tpu_custom_call.1} parent=1 // pred_check
      _
    $region11: #{tpu_custom_call.1} parent=1 // pred_check_branch
      %36 = sbr.rel (0) target = $region13
    $region12: #{tpu_custom_call.1} parent=1 // pred_region
      _
    $region13: #{tpu_custom_call.1} parent=1 // pred_fallthru
      _
    // Predicated region
    $region14: #{tpu_custom_call.1} parent=1 // pred_check
      _
    $region15: #{tpu_custom_call.1} parent=1 // pred_check_branch
      %38 = sbr.rel (0) target = $region17
    $region16: #{tpu_custom_call.1} parent=1 // pred_region
      %40 = dma.done [#allocation3], 896
    $region17: #{tpu_custom_call.1} parent=1 // pred_fallthru
      _
    // Predicated region
    $region18: #{tpu_custom_call.1} parent=1 // pred_check
      _
    $region19: #{tpu_custom_call.1} parent=1 // pred_check_branch
      %42 = sbr.rel (0) target = $region21
    $region20: #{tpu_custom_call.1} parent=1 // pred_region
      %44 = dma.done [#allocation6], 12544
    $region21: #{tpu_custom_call.1} parent=1 // pred_fallthru
      _
    %v45 = vld [vmem:[#allocation2] sm:$0xff]
    %v46 = vld [vmem:[#allocation2 + $0x8] sm:$0xff]
    %v47 = vld [vmem:[#allocation2 + $0x10] sm:$0xff]
    %v48 = vld [vmem:[#allocation2 + $0x18] sm:$0xff]
    %v49 = vld [vmem:[#allocation2 + $0x20] sm:$0xff]
    %v50 = vld [vmem:[#allocation2 + $0x28] sm:$0xff]
    %v51 = vld [vmem:[#allocation2 + $0x30] sm:$0xff]
    %v52 = vld [vmem:[#allocation5] sm:$0xff]
    %v53 = vld [vmem:[#allocation5 + $0x8] sm:$0xff]
    %v54 = vld [vmem:[#allocation5 + $0x10] sm:$0xff]
    %v55 = vld [vmem:[#allocation5 + $0x18] sm:$0xff]
    %v56 = vld [vmem:[#allocation5 + $0x20] sm:$0xff]
    %v57 = vld [vmem:[#allocation5 + $0x28] sm:$0xff]
    %v58 = vld [vmem:[#allocation5 + $0x30] sm:$0xff]
    %v59 = vld [vmem:[#allocation5 + $0x38] sm:$0xff]
    %v60 = vld [vmem:[#allocation5 + $0x40] sm:$0xff]
    %v61 = vld [vmem:[#allocation5 + $0x48] sm:$0xff]
    %v62 = vld [vmem:[#allocation5 + $0x50] sm:$0xff]
    %v63 = vld [vmem:[#allocation5 + $0x58] sm:$0xff]
    %v64 = vld [vmem:[#allocation5 + $0x60] sm:$0xff]
    %v65 = vld [vmem:[#allocation5 + $0x68] sm:$0xff]
    %v66 = vld [vmem:[#allocation5 + $0x70] sm:$0xff]
    %v67 = vld [vmem:[#allocation5 + $0x78] sm:$0xff]
    %v68 = vld [vmem:[#allocation5 + $0x80] sm:$0xff]
    %v69 = vld [vmem:[#allocation5 + $0x88] sm:$0xff]
    %v70 = vld [vmem:[#allocation5 + $0x90] sm:$0xff]
    %v71 = vld [vmem:[#allocation5 + $0x98] sm:$0xff]
    %v72 = vld [vmem:[#allocation5 + $0xa0] sm:$0xff]
    %v73 = vld [vmem:[#allocation5 + $0xa8] sm:$0xff]
    %v74 = vld [vmem:[#allocation5 + $0xb0] sm:$0xff]
    %v75 = vld [vmem:[#allocation5 + $0xb8] sm:$0xff]
    %v76 = vld [vmem:[#allocation5 + $0xc0] sm:$0xff]
    %v77 = vld [vmem:[#allocation5 + $0xc8] sm:$0xff]
    %v78 = vld [vmem:[#allocation5 + $0xd0] sm:$0xff]
    %v79 = vld [vmem:[#allocation5 + $0xd8] sm:$0xff]
    %v80 = vld [vmem:[#allocation5 + $0xe0] sm:$0xff]
    %v81 = vld [vmem:[#allocation5 + $0xe8] sm:$0xff]
    %v82 = vld [vmem:[#allocation5 + $0xf0] sm:$0xff]
    %v83 = vld [vmem:[#allocation5 + $0xf8] sm:$0xff]
    %v84 = vld [vmem:[#allocation5 + $0x100] sm:$0xff]
    %v85 = vld [vmem:[#allocation5 + $0x108] sm:$0xff]
    %v86 = vld [vmem:[#allocation5 + $0x110] sm:$0xff]
    %v87 = vld [vmem:[#allocation5 + $0x118] sm:$0xff]
    %v88 = vld [vmem:[#allocation5 + $0x120] sm:$0xff]
    %v89 = vld [vmem:[#allocation5 + $0x128] sm:$0xff]
    %v90 = vld [vmem:[#allocation5 + $0x130] sm:$0xff]
    %v91 = vld [vmem:[#allocation5 + $0x138] sm:$0xff]
    %v92 = vld [vmem:[#allocation5 + $0x140] sm:$0xff]
    %v93 = vld [vmem:[#allocation5 + $0x148] sm:$0xff]
    %v94 = vld [vmem:[#allocation5 + $0x150] sm:$0xff]
    %v95 = vld [vmem:[#allocation5 + $0x158] sm:$0xff]
    %v96 = vld [vmem:[#allocation5 + $0x160] sm:$0xff]
    %v97 = vld [vmem:[#allocation5 + $0x168] sm:$0xff]
    %v98 = vld [vmem:[#allocation5 + $0x170] sm:$0xff]
    %v99 = vld [vmem:[#allocation5 + $0x178] sm:$0xff]
    %v100 = vld [vmem:[#allocation5 + $0x180] sm:$0xff]
    %v101 = vld [vmem:[#allocation5 + $0x188] sm:$0xff]
    %v102 = vld [vmem:[#allocation5 + $0x190] sm:$0xff]
    %v103 = vld [vmem:[#allocation5 + $0x198] sm:$0xff]
    %v104 = vld [vmem:[#allocation5 + $0x1a0] sm:$0xff]
    %v105 = vld [vmem:[#allocation5 + $0x1a8] sm:$0xff]
    %v106 = vld [vmem:[#allocation5 + $0x1b0] sm:$0xff]
    %v107 = vld [vmem:[#allocation5 + $0x1b8] sm:$0xff]
    %v108 = vld [vmem:[#allocation5 + $0x1c0] sm:$0xff]
    %v109 = vld [vmem:[#allocation5 + $0x1c8] sm:$0xff]
    %v110 = vld [vmem:[#allocation5 + $0x1d0] sm:$0xff]
    %v111 = vld [vmem:[#allocation5 + $0x1d8] sm:$0xff]
    %v112 = vld [vmem:[#allocation5 + $0x1e0] sm:$0xff]
    %v113 = vld [vmem:[#allocation5 + $0x1e8] sm:$0xff]
    %v114 = vld [vmem:[#allocation5 + $0x1f0] sm:$0xff]
    %v115 = vld [vmem:[#allocation5 + $0x1f8] sm:$0xff]
    %v116 = vld [vmem:[#allocation5 + $0x200] sm:$0xff]
    %v117 = vld [vmem:[#allocation5 + $0x208] sm:$0xff]
    %v118 = vld [vmem:[#allocation5 + $0x210] sm:$0xff]
    %v119 = vld [vmem:[#allocation5 + $0x218] sm:$0xff]
    %v120 = vld [vmem:[#allocation5 + $0x220] sm:$0xff]
    %v121 = vld [vmem:[#allocation5 + $0x228] sm:$0xff]
    %v122 = vld [vmem:[#allocation5 + $0x230] sm:$0xff]
    %v123 = vld [vmem:[#allocation5 + $0x238] sm:$0xff]
    %v124 = vld [vmem:[#allocation5 + $0x240] sm:$0xff]
    %v125 = vld [vmem:[#allocation5 + $0x248] sm:$0xff]
    %v126 = vld [vmem:[#allocation5 + $0x250] sm:$0xff]
    %v127 = vld [vmem:[#allocation5 + $0x258] sm:$0xff]
    %v128 = vld [vmem:[#allocation5 + $0x260] sm:$0xff]
    %v129 = vld [vmem:[#allocation5 + $0x268] sm:$0xff]
    %v130 = vld [vmem:[#allocation5 + $0x270] sm:$0xff]
    %v131 = vld [vmem:[#allocation5 + $0x278] sm:$0xff]
    %v132 = vld [vmem:[#allocation5 + $0x280] sm:$0xff]
    %v133 = vld [vmem:[#allocation5 + $0x288] sm:$0xff]
    %v134 = vld [vmem:[#allocation5 + $0x290] sm:$0xff]
    %v135 = vld [vmem:[#allocation5 + $0x298] sm:$0xff]
    %v136 = vld [vmem:[#allocation5 + $0x2a0] sm:$0xff]
    %v137 = vld [vmem:[#allocation5 + $0x2a8] sm:$0xff]
    %v138 = vld [vmem:[#allocation5 + $0x2b0] sm:$0xff]
    %v139 = vld [vmem:[#allocation5 + $0x2b8] sm:$0xff]
    %v140 = vld [vmem:[#allocation5 + $0x2c0] sm:$0xff]
    %v141 = vld [vmem:[#allocation5 + $0x2c8] sm:$0xff]
    %v142 = vld [vmem:[#allocation5 + $0x2d0] sm:$0xff]
    %v143 = vld [vmem:[#allocation5 + $0x2d8] sm:$0xff]
    %v144 = vld [vmem:[#allocation5 + $0x2e0] sm:$0xff]
    %v145 = vld [vmem:[#allocation5 + $0x2e8] sm:$0xff]
    %v146 = vld [vmem:[#allocation5 + $0x2f0] sm:$0xff]
    %v147 = vld [vmem:[#allocation5 + $0x2f8] sm:$0xff]
    %v148 = vld [vmem:[#allocation5 + $0x300] sm:$0xff]
    %v149 = vld [vmem:[#allocation5 + $0x308] sm:$0xff]
    %v150 = vld [vmem:[%s2] sm:$0x1]
    %v152 = vperm.slane %v150, 0
    %vm154 = vcmask 130048
    %v156 = vsel %vm154, %v51, 0
    %158 = vmatpush.msra.mxu0 %v67
    %159 = vmatpush.msra.mxu0 %v66
    %160 = vmatpush.msra.mxu0 %v65
    %161 = vmatpush.msra.mxu0 %v64
    %162 = vmatpush.msra.mxu0 %v63
    %163 = vmatpush.msra.mxu0 %v62
    %164 = vmatpush.msra.mxu0 %v61
    %165 = vmatpush.msra.mxu0 %v60
    %166 = vmatpush.msra.mxu0 %v59
    %167 = vmatpush.msra.mxu0 %v58
    %168 = vmatpush.msra.mxu0 %v57
    %169 = vmatpush.msra.mxu0 %v56
    %170 = vmatpush.msra.mxu0 %v55
    %171 = vmatpush.msra.mxu0 %v54
    %172 = vmatpush.msra.mxu0 %v53
    %173 = vmatpush.msra.mxu0 %v52
    %174 = vmatmul.f32.gmra.mxu0 %v45
    %v175 = vpop.f32.mrf.mxu0
    %v176 = vadd.f32 %v152, %v175
    %177 = vdwg.mxu0
    %178 = vmatpush.msra.mxu0 %v83
    %179 = vmatpush.msra.mxu0 %v82
    %180 = vmatpush.msra.mxu0 %v81
    %181 = vmatpush.msra.mxu0 %v80
    %182 = vmatpush.msra.mxu0 %v79
    %183 = vmatpush.msra.mxu0 %v78
    %184 = vmatpush.msra.mxu0 %v77
    %185 = vmatpush.msra.mxu0 %v76
    %186 = vmatpush.msra.mxu0 %v75
    %187 = vmatpush.msra.mxu0 %v74
    %188 = vmatpush.msra.mxu0 %v73
    %189 = vmatpush.msra.mxu0 %v72
    %190 = vmatpush.msra.mxu0 %v71
    %191 = vmatpush.msra.mxu0 %v70
    %192 = vmatpush.msra.mxu0 %v69
    %193 = vmatpush.msra.mxu0 %v68
    %194 = vmatmul.f32.gmra.mxu0 %v46
    %v195 = vpop.f32.mrf.mxu0
    %v196 = vadd.f32 %v176, %v195
    %197 = vdwg.mxu0
    %198 = vmatpush.msra.mxu0 %v99
    %199 = vmatpush.msra.mxu0 %v98
    %200 = vmatpush.msra.mxu0 %v97
    %201 = vmatpush.msra.mxu0 %v96
    %202 = vmatpush.msra.mxu0 %v95
    %203 = vmatpush.msra.mxu0 %v94
    %204 = vmatpush.msra.mxu0 %v93
    %205 = vmatpush.msra.mxu0 %v92
    %206 = vmatpush.msra.mxu0 %v91
    %207 = vmatpush.msra.mxu0 %v90
    %208 = vmatpush.msra.mxu0 %v89
    %209 = vmatpush.msra.mxu0 %v88
    %210 = vmatpush.msra.mxu0 %v87
    %211 = vmatpush.msra.mxu0 %v86
    %212 = vmatpush.msra.mxu0 %v85
    %213 = vmatpush.msra.mxu0 %v84
    %214 = vmatmul.f32.gmra.mxu0 %v47
    %v215 = vpop.f32.mrf.mxu0
    %v216 = vadd.f32 %v196, %v215
    %217 = vdwg.mxu0
    %218 = vmatpush.msra.mxu0 %v115
    %219 = vmatpush.msra.mxu0 %v114
    %220 = vmatpush.msra.mxu0 %v113
    %221 = vmatpush.msra.mxu0 %v112
    %222 = vmatpush.msra.mxu0 %v111
    %223 = vmatpush.msra.mxu0 %v110
    %224 = vmatpush.msra.mxu0 %v109
    %225 = vmatpush.msra.mxu0 %v108
    %226 = vmatpush.msra.mxu0 %v107
    %227 = vmatpush.msra.mxu0 %v106
    %228 = vmatpush.msra.mxu0 %v105
    %229 = vmatpush.msra.mxu0 %v104
    %230 = vmatpush.msra.mxu0 %v103
    %231 = vmatpush.msra.mxu0 %v102
    %232 = vmatpush.msra.mxu0 %v101
    %233 = vmatpush.msra.mxu0 %v100
    %234 = vmatmul.f32.gmra.mxu0 %v48
    %v235 = vpop.f32.mrf.mxu0
    %v236 = vadd.f32 %v216, %v235
    %237 = vdwg.mxu0
    %238 = vmatpush.msra.mxu0 %v131
    %239 = vmatpush.msra.mxu0 %v130
    %240 = vmatpush.msra.mxu0 %v129
    %241 = vmatpush.msra.mxu0 %v128
    %242 = vmatpush.msra.mxu0 %v127
    %243 = vmatpush.msra.mxu0 %v126
    %244 = vmatpush.msra.mxu0 %v125
    %245 = vmatpush.msra.mxu0 %v124
    %246 = vmatpush.msra.mxu0 %v123
    %247 = vmatpush.msra.mxu0 %v122
    %248 = vmatpush.msra.mxu0 %v121
    %249 = vmatpush.msra.mxu0 %v120
    %250 = vmatpush.msra.mxu0 %v119
    %251 = vmatpush.msra.mxu0 %v118
    %252 = vmatpush.msra.mxu0 %v117
    %253 = vmatpush.msra.mxu0 %v116
    %254 = vmatmul.f32.gmra.mxu0 %v49
    %v255 = vpop.f32.mrf.mxu0
    %v256 = vadd.f32 %v236, %v255
    %257 = vdwg.mxu0
    %258 = vmatpush.msra.mxu0 %v147
    %259 = vmatpush.msra.mxu0 %v146
    %260 = vmatpush.msra.mxu0 %v145
    %261 = vmatpush.msra.mxu0 %v144
    %262 = vmatpush.msra.mxu0 %v143
    %263 = vmatpush.msra.mxu0 %v142
    %264 = vmatpush.msra.mxu0 %v141
    %265 = vmatpush.msra.mxu0 %v140
    %266 = vmatpush.msra.mxu0 %v139
    %267 = vmatpush.msra.mxu0 %v138
    %268 = vmatpush.msra.mxu0 %v137
    %269 = vmatpush.msra.mxu0 %v136
    %270 = vmatpush.msra.mxu0 %v135
    %271 = vmatpush.msra.mxu0 %v134
    %272 = vmatpush.msra.mxu0 %v133
    %273 = vmatpush.msra.mxu0 %v132
    %274 = vmatmul.f32.gmra.mxu0 %v50
    %v275 = vpop.f32.mrf.mxu0
    %v276 = vadd.f32 %v256, %v275
    %277 = vdwg.mxu0
    %278 = vmatpush.msra.mxu0 0.0
    %279 = vmatpush.msra.mxu0 0.0
    %280 = vmatpush.msra.mxu0 0.0
    %281 = vmatpush.msra.mxu0 0.0
    %282 = vmatpush.msra.mxu0 0.0
    %283 = vmatpush.msra.mxu0 0.0
    %284 = vmatpush.msra.mxu0 0.0
    %285 = vmatpush.msra.mxu0 0.0
    %286 = vmatpush.msra.mxu0 0.0
    %287 = vmatpush.msra.mxu0 0.0
    %288 = vmatpush.msra.mxu0 0.0
    %289 = vmatpush.msra.mxu0 0.0
    %290 = vmatpush.msra.mxu0 0.0
    %291 = vmatpush.msra.mxu0 0.0
    %292 = vmatpush.msra.mxu0 %v149
    %293 = vmatpush.msra.mxu0 %v148
    %294 = vmatmul.f32.gmra.mxu0 %v156
    %v295 = vpop.f32.mrf.mxu0
    %v296 = vadd.f32 %v276, %v295
    %297 = vdwg.mxu0
    %298 = vst [vmem:[#allocation7] sm:$0xff] %v296
    // Predicated region
    $region22: #{tpu_custom_call.1} parent=1 // pred_check
      _
    $region23: #{tpu_custom_call.1} parent=1 // pred_check_branch
      %300 = sbr.rel (0) target = $region25
    $region24: #{tpu_custom_call.1} parent=1 // pred_region
      %302 = vsyncadd [#allocation4], 0
      %s304 = sshll.u32 [#allocation7], 4
      %s305 = int_to_ptr.vmem [resolvable:$true] %s304
      %s306 = sshll.u32 %s3, 4
      %s307 = int_to_ptr.hbm [resolvable:$true] %s306
      %309 = dma.vmem_to_hbm [thread:$0]  %s305, 128, %s307, [#allocation4]
    $region25: #{tpu_custom_call.1} parent=1 // pred_fallthru
      _
    // Predicated region
    $region26: #{tpu_custom_call.1} parent=1 // pred_check
      _
    $region27: #{tpu_custom_call.1} parent=1 // pred_check_branch
      %311 = sbr.rel (0) target = $region29
    $region28: #{tpu_custom_call.1} parent=1 // pred_region
      %313 = dma.done [#allocation4], 128
    $region29: #{tpu_custom_call.1} parent=1 // pred_fallthru
      _
    %314 = vsyncpa [#allocation3], 1
    %315 = vsyncpa [#allocation6], 1
    %316 = vsyncpa [#allocation4], 1

</llo_original>
